<compile_context>
chip_gen: v7x
topology: tpu7x:2x2x1
jax: 0.10.0
libtpu: 0.0.40
codegen_flags: <defaults>
</compile_context>

<pallas_src>
import functools

import jax
import jax.numpy as jnp
from jax.experimental import pallas as pl
from jax.experimental.pallas import tpu as pltpu

EPS = 1e-5
_MIB = 1024 * 1024
_MAX_CT = 1024          # upper bound on the channel tile (lanes)
_VMEM_BUDGET = 40 * _MIB  # conservative working-set target (v7x has 64 MiB)


def _fused_forecast_kernel(x_ref, w_ref, b_ref, wr_ref, gb_ref, o_ref):
    # x_ref  : (L, Ct)  one batch element's time x channel slab (caller dtype)
    # w_ref  : (P, L)   forecaster weight, bf16 (f32 accumulate on the MXU)
    # b_ref  : (P, 1)   forecaster bias, f32
    # wr_ref : (P, 1)   rowsum(W) in f32 (for the hoisted beta term)
    # gb_ref : (2, Ct)  row 0 = gamma, row 1 = beta (RevIN affine per channel)
    # o_ref  : (P, Ct)  forecast slab, caller dtype
    x = x_ref[...].astype(jnp.float32)                       # (L, Ct)
    inv_L = 1.0 / x.shape[0]

    # ---- RevIN 'norm' statistics: two-pass per-channel mean/var over time ----
    mean = jnp.sum(x, axis=0, keepdims=True) * inv_L         # (1, Ct)
    xc = x - mean                                            # (L, Ct)
    var = jnp.sum(xc * xc, axis=0, keepdims=True) * inv_L    # (1, Ct)
    stdev = jnp.sqrt(var + EPS)                              # (1, Ct)  EUP
    inv_std = jax.lax.rsqrt(var + EPS)                       # (1, Ct)  EUP

    gamma = gb_ref[0:1, :]                                   # (1, Ct)
    beta = gb_ref[1:2, :]                                    # (1, Ct)

    # ---- forecast: MXU matmul on centered-only data, affine hoisted out ----
    #   W @ ((x-mean)*inv_std*gamma + beta) + b
    #     == (W @ (x-mean)) * (inv_std*gamma) + rowsum(W)*beta + b
    wx = jnp.dot(w_ref[...], xc.astype(jnp.bfloat16),
                 preferred_element_type=jnp.float32)         # (P, Ct)
    s = inv_std * gamma                                      # (1, Ct)
    fc_n = wx * s + wr_ref[...] * beta + b_ref[...]          # (P, Ct)

    # ---- RevIN 'denorm': invert affine, rescale with the saved stats ----
    inv_g = pl.reciprocal(gamma + EPS * EPS, approx=True)    # (1, Ct)  EUP
    o_ref[...] = ((fc_n - beta) * inv_g * stdev + mean).astype(o_ref.dtype)


def _pick_channel_tile(C, L, P, in_bytes, out_bytes):
    """Largest legal channel tile that divides C and fits the VMEM budget."""
    def working_set(ct):
        x_blk = in_bytes * L * ct                 # input slab
        o_blk = out_bytes * P * ct                # output slab
        gb_blk = 4 * 2 * ct                       # gamma/beta slab
        temps = 6 * L * ct + 12 * ct + 12 * P * ct  # xc f32+bf16, stats, (P,Ct)
        consts = 2 * P * L + 8 * P                # bf16 W + bias/rowsum
        return 2 * (x_blk + o_blk + gb_blk + consts) + temps

    if C % 128 != 0:
        # A block whose last dim equals the full array dim is always legal.
        # TODO(synk): a huge ragged C (not a multiple of 128) would need
        # channel padding to tile; not needed for these shapes.
        return C, working_set(C)

    ct = min(C, _MAX_CT)
    ct -= ct % 128
    while ct > 128 and (C % ct != 0 or working_set(ct) > _VMEM_BUDGET):
        ct -= 128
    return ct, working_set(ct)


@jax.jit
def model_forward(batch_x, weight, bias, gamma, beta):
    """Fused RevIN-norm -> Linear(L, P) forecast -> RevIN-denorm.

    batch_x : (B, L, C)
    weight  : (P, L)   nn.Linear(L, P).weight
    bias    : (P,)
    gamma   : (C,)     RevIN affine weight
    beta    : (C,)     RevIN affine bias
    returns (forecast (B, P, C), 1)  — mirroring Model.forward's (forecast, 1)
    """
    B, L, C = batch_x.shape
    P = weight.shape[0]
    out_dtype = batch_x.dtype

    in_bytes = jnp.dtype(batch_x.dtype).itemsize
    out_bytes = jnp.dtype(out_dtype).itemsize
    Ct, ws = _pick_channel_tile(C, L, P, in_bytes, out_bytes)
    n_ct = C // Ct

    vmem_limit = int(min(max(32 * _MIB, ws + 8 * _MIB), 56 * _MIB))

    # Parameter prep (tiny, one-time): bf16 MXU weight, f32 rowsum / bias,
    # gamma & beta packed into a single (2, C) stream.
    w_bf16 = weight.astype(jnp.bfloat16)                               # (P, L)
    w_rowsum = jnp.sum(weight.astype(jnp.float32), axis=1,
                       keepdims=True)                                  # (P, 1)
    bias2d = bias.reshape(P, 1).astype(jnp.float32)                    # (P, 1)
    gb = jnp.stack([gamma.astype(jnp.float32),
                    beta.astype(jnp.float32)], axis=0)                 # (2, C)

    forecast = pl.pallas_call(
        _fused_forecast_kernel,
        out_shape=jax.ShapeDtypeStruct((B, P, C), out_dtype),
        grid_spec=pltpu.PrefetchScalarGridSpec(
            num_scalar_prefetch=0,
            grid=(B, n_ct),
            in_specs=[
                # batch_x read in place: one (L, Ct) slab per (b, ct) step.
                pl.BlockSpec((pl.Squeezed(), L, Ct), lambda b, ct: (b, 0, ct)),
                pl.BlockSpec((P, L), lambda b, ct: (0, 0)),    # W (constant)
                pl.BlockSpec((P, 1), lambda b, ct: (0, 0)),    # bias
                pl.BlockSpec((P, 1), lambda b, ct: (0, 0)),    # rowsum(W)
                pl.BlockSpec((2, Ct), lambda b, ct: (0, ct)),  # gamma/beta
            ],
            out_specs=pl.BlockSpec((pl.Squeezed(), P, Ct),
                                   lambda b, ct: (b, 0, ct)),
        ),
        compiler_params=pltpu.CompilerParams(
            dimension_semantics=("parallel", "parallel"),
            vmem_limit_bytes=vmem_limit,
        ),
    )(batch_x, w_bf16, bias2d, w_rowsum, gb)

    return forecast, 1


def _reference(batch_x, weight, bias, gamma, beta):
    # Pure-JAX f32 reference with the original (un-hoisted) RevIN semantics.
    x = batch_x.astype(jnp.float32)
    mean = jnp.mean(x, axis=1, keepdims=True)
    var = jnp.mean((x - mean) ** 2, axis=1, keepdims=True)
    stdev = jnp.sqrt(var + EPS)
    nx = (x - mean) / stdev * gamma + beta                      # (B, L, C)
    fc = jnp.einsum("pl,blc->bpc", weight.astype(jnp.float32), nx)
    fc = fc + bias[None, :, None]
    fc = (fc - beta) / (gamma + EPS * EPS)
    fc = fc * stdev + mean
    return fc


if __name__ == "__main__":
    key = jax.random.PRNGKey(0)
    B, L, C, P = 2, 16, 8, 8      # batch, seq_len, channels, pred_len

    k1, k2, k3, k4, k5 = jax.random.split(key, 5)
    batch_x = jax.random.normal(k1, (B, L, C), dtype=jnp.float32)
    labels = jax.random.normal(k2, (B, P, C), dtype=jnp.float32)  # unused, as in Model.forward

    # Deterministic parameter init (forecaster Linear(L, P) + RevIN affine).
    weight = jax.random.normal(k3, (P, L), dtype=jnp.float32) * (1.0 / jnp.sqrt(L))
    bias = 0.1 * jax.random.normal(k4, (P,), dtype=jnp.float32)
    gamma = 1.0 + 0.1 * jax.random.normal(k5, (C,), dtype=jnp.float32)
    beta = jnp.full((C,), 0.05, dtype=jnp.float32)

    forecast, flag = model_forward(batch_x, weight, bias, gamma, beta)
    forecast = jax.block_until_ready(forecast)

    ref = _reference(batch_x, weight, bias, gamma, beta)
    assert forecast.shape == (B, P, C)
    assert flag == 1
    max_err = float(jnp.max(jnp.abs(forecast - ref)))
    assert jnp.allclose(forecast, ref, atol=2e-2, rtol=2e-2), max_err

    print("KERNEL_OK")
</pallas_src>

<mosaic_0001>
module attributes {stable_mosaic.version = 11 : i64} {
  func.func @_fused_forecast_kernel(%arg0: i32, %arg1: i32, %arg2: memref<1x16x8xf32, #tpu.memory_space<vmem>>, %arg3: memref<8x16xbf16, #tpu.memory_space<vmem>>, %arg4: memref<8x1xf32, #tpu.memory_space<vmem>>, %arg5: memref<8x1xf32, #tpu.memory_space<vmem>>, %arg6: memref<2x8xf32, #tpu.memory_space<vmem>>, %arg7: memref<1x8x8xf32, #tpu.memory_space<vmem>>) attributes {dimension_semantics = [#tpu.dimension_semantics<parallel>, #tpu.dimension_semantics<parallel>], iteration_bounds = array<i64: 2, 1>, scalar_prefetch = 0 : i64, scratch_operands = 0 : i64, tpu.core_type = #tpu.core_type<tc>, window_params = [{transform_indices = @transform_0, window_bounds = array<i64: 1, 16, 8>}, {pipeline_mode = #tpu.pipeline_mode<synchronous>, transform_indices = @transform_1, window_bounds = array<i64: 8, 16>}, {pipeline_mode = #tpu.pipeline_mode<synchronous>, transform_indices = @transform_2, window_bounds = array<i64: 8, 1>}, {pipeline_mode = #tpu.pipeline_mode<synchronous>, transform_indices = @transform_3, window_bounds = array<i64: 8, 1>}, {transform_indices = @transform_4, window_bounds = array<i64: 2, 8>}, {transform_indices = @transform_5, window_bounds = array<i64: 1, 8, 8>}]} {
    %c0 = arith.constant 0 : index
    %c0_0 = arith.constant 0 : index
    %c0_1 = arith.constant 0 : index
    %0 = vector.load %arg2[%c0, %c0_0, %c0_1] : memref<1x16x8xf32, #tpu.memory_space<vmem>>, vector<1x16x8xf32>
    %1 = vector.shape_cast %0 : vector<1x16x8xf32> to vector<16x8xf32>
    %cst = arith.constant dense<0.000000e+00> : vector<8xf32>
    %2 = vector.multi_reduction <add>, %1, %cst [0] : vector<16x8xf32> to vector<8xf32>
    %3 = vector.shape_cast %2 : vector<8xf32> to vector<1x8xf32>
    %cst_2 = arith.constant 6.250000e-02 : f32
    %4 = vector.broadcast %cst_2 : f32 to vector<1x8xf32>
    %5 = arith.mulf %3, %4 : vector<1x8xf32>
    %6 = vector.broadcast %5 : vector<1x8xf32> to vector<16x8xf32>
    %7 = arith.subf %1, %6 : vector<16x8xf32>
    %8 = arith.mulf %7, %7 : vector<16x8xf32>
    %cst_3 = arith.constant dense<0.000000e+00> : vector<8xf32>
    %9 = vector.multi_reduction <add>, %8, %cst_3 [0] : vector<16x8xf32> to vector<8xf32>
    %10 = vector.shape_cast %9 : vector<8xf32> to vector<1x8xf32>
    %cst_4 = arith.constant 6.250000e-02 : f32
    %11 = vector.broadcast %cst_4 : f32 to vector<1x8xf32>
    %12 = arith.mulf %10, %11 : vector<1x8xf32>
    %cst_5 = arith.constant 9.99999974E-6 : f32
    %13 = vector.broadcast %cst_5 : f32 to vector<1x8xf32>
    %14 = arith.addf %12, %13 : vector<1x8xf32>
    %15 = math.sqrt %14 : vector<1x8xf32>
    %cst_6 = arith.constant 9.99999974E-6 : f32
    %16 = vector.broadcast %cst_6 : f32 to vector<1x8xf32>
    %17 = arith.addf %12, %16 : vector<1x8xf32>
    %18 = math.rsqrt %17 : vector<1x8xf32>
    %c0_7 = arith.constant 0 : index
    %c0_8 = arith.constant 0 : index
    %19 = vector.load %arg6[%c0_7, %c0_8] : memref<2x8xf32, #tpu.memory_space<vmem>>, vector<1x8xf32>
    %c1 = arith.constant 1 : index
    %c0_9 = arith.constant 0 : index
    %20 = vector.load %arg6[%c1, %c0_9] : memref<2x8xf32, #tpu.memory_space<vmem>>, vector<1x8xf32>
    %c0_10 = arith.constant 0 : index
    %c0_11 = arith.constant 0 : index
    %21 = vector.load %arg3[%c0_10, %c0_11] : memref<8x16xbf16, #tpu.memory_space<vmem>>, vector<8x16xbf16>
    %22 = arith.truncf %7 : vector<16x8xf32> to vector<16x8xbf16>
    %cst_12 = arith.constant dense<0.000000e+00> : vector<8x8xf32>
    %23 = tpu.matmul %21, %22, %cst_12 {dimension_numbers = #tpu.dot_dimension_numbers<[1], [0], [0], [1], [0, 0, 1, 1], [], []>} : vector<8x16xbf16>, vector<16x8xbf16>, vector<8x8xf32> -> vector<8x8xf32>
    %24 = arith.mulf %18, %19 : vector<1x8xf32>
    %25 = vector.broadcast %24 : vector<1x8xf32> to vector<8x8xf32>
    %26 = arith.mulf %23, %25 : vector<8x8xf32>
    %c0_13 = arith.constant 0 : index
    %c0_14 = arith.constant 0 : index
    %27 = vector.load %arg5[%c0_13, %c0_14] : memref<8x1xf32, #tpu.memory_space<vmem>>, vector<8x1xf32>
    %28 = vector.broadcast %27 : vector<8x1xf32> to vector<8x8xf32>
    %29 = vector.broadcast %20 : vector<1x8xf32> to vector<8x8xf32>
    %30 = arith.mulf %28, %29 : vector<8x8xf32>
    %31 = arith.addf %26, %30 : vector<8x8xf32>
    %c0_15 = arith.constant 0 : index
    %c0_16 = arith.constant 0 : index
    %32 = vector.load %arg4[%c0_15, %c0_16] : memref<8x1xf32, #tpu.memory_space<vmem>>, vector<8x1xf32>
    %33 = vector.broadcast %32 : vector<8x1xf32> to vector<8x8xf32>
    %34 = arith.addf %31, %33 : vector<8x8xf32>
    %cst_17 = arith.constant 1.000000e-10 : f32
    %35 = vector.broadcast %cst_17 : f32 to vector<1x8xf32>
    %36 = arith.addf %19, %35 : vector<1x8xf32>
    %37 = tpu.reciprocal %36 {approx = true} : vector<1x8xf32> -> vector<1x8xf32>
    %38 = vector.broadcast %20 : vector<1x8xf32> to vector<8x8xf32>
    %39 = arith.subf %34, %38 : vector<8x8xf32>
    %40 = vector.broadcast %37 : vector<1x8xf32> to vector<8x8xf32>
    %41 = arith.mulf %39, %40 : vector<8x8xf32>
    %42 = vector.broadcast %15 : vector<1x8xf32> to vector<8x8xf32>
    %43 = arith.mulf %41, %42 : vector<8x8xf32>
    %44 = vector.broadcast %5 : vector<1x8xf32> to vector<8x8xf32>
    %45 = arith.addf %43, %44 : vector<8x8xf32>
    %c0_18 = arith.constant 0 : index
    %c0_19 = arith.constant 0 : index
    %c0_20 = arith.constant 0 : index
    %46 = vector.load %arg7[%c0_18, %c0_19, %c0_20] : memref<1x8x8xf32, #tpu.memory_space<vmem>>, vector<1x8x8xf32>
    %47 = vector.shape_cast %46 : vector<1x8x8xf32> to vector<8x8xf32>
    %48 = vector.shape_cast %45 : vector<8x8xf32> to vector<1x8x8xf32>
    tpu.vector_store %arg7[%c0_18, %c0_19, %c0_20], %48 {strides = array<i32>} : memref<1x8x8xf32, #tpu.memory_space<vmem>>, vector<1x8x8xf32>,
    return
  }
  func.func @transform_0(%arg0: i32, %arg1: i32) -> (i32, i32, i32) {
    %c0_i32 = arith.constant 0 : i32
    %c0_i32_0 = arith.constant 0 : i32
    return %arg0, %c0_i32, %arg1 : i32, i32, i32
  }
  func.func @transform_1(%arg0: i32, %arg1: i32) -> (i32, i32) {
    %c0_i32 = arith.constant 0 : i32
    %c0_i32_0 = arith.constant 0 : i32
    %c0_i32_1 = arith.constant 0 : i32
    return %c0_i32, %c0_i32_0 : i32, i32
  }
  func.func @transform_2(%arg0: i32, %arg1: i32) -> (i32, i32) {
    %c0_i32 = arith.constant 0 : i32
    %c0_i32_0 = arith.constant 0 : i32
    %c0_i32_1 = arith.constant 0 : i32
    return %c0_i32, %c0_i32_0 : i32, i32
  }
  func.func @transform_3(%arg0: i32, %arg1: i32) -> (i32, i32) {
    %c0_i32 = arith.constant 0 : i32
    %c0_i32_0 = arith.constant 0 : i32
    %c0_i32_1 = arith.constant 0 : i32
    return %c0_i32, %c0_i32_0 : i32, i32
  }
  func.func @transform_4(%arg0: i32, %arg1: i32) -> (i32, i32) {
    %c0_i32 = arith.constant 0 : i32
    %c0_i32_0 = arith.constant 0 : i32
    return %c0_i32, %arg1 : i32, i32
  }
  func.func @transform_5(%arg0: i32, %arg1: i32) -> (i32, i32, i32) {
    %c0_i32 = arith.constant 0 : i32
    %c0_i32_0 = arith.constant 0 : i32
    return %arg0, %c0_i32, %arg1 : i32, i32, i32
  }
}

</mosaic_0001>

<llo_original>
// kernel: model_forward.1
$region0: #{model_forward.1}
  #allocation0 [shape = 'u32[]', space=smem, size = 0x4, offset = 0x4, fixed_abs, tag = 'smem constant byte address 0x4 - core index']
  #allocation1 [shape = 'u32[144,128]{1,0:T(1,128)}', space=vmem, size = 0x12000, scoped, tag = 'internal scratch']
  %s0 = inlined_call_operand.vmem [shape: f32[2,16,8], index: 0, kind: input, shape index: {}]
  %s1 = inlined_call_operand.vmem [shape: bf16[8,16], index: 1, kind: input, shape index: {}]
  %s2 = inlined_call_operand.vmem [shape: f32[8,1], index: 2, kind: input, shape index: {}]
  %s3 = inlined_call_operand.vmem [shape: f32[8,1], index: 3, kind: input, shape index: {}]
  %s4 = inlined_call_operand.vmem [shape: f32[2,8], index: 4, kind: input, shape index: {}]
  %s5 = inlined_call_operand.hbm [shape: f32[2,8,8], index: 5, kind: output, shape index: {}]
  %s6 = sld [smem:[#allocation0]]
  $region53: #{model_forward.1} parent=0
    _
  %s8 = ssub.s32 1, %s6
  %s9 = scalar_select 0, %s8, %s6
  $region1: #{model_forward.1} parent=0
    #allocation2 [shape = 'u8[8192]{0}', space=vmem, size = 0x2000, scoped, tag = 'output window, operand 0']
    #allocation3 [shape = 's32[2]{0}', space=sflag, size = 0x8, scoped, tag = 'scoped memory for model_forward.1']
    %10 = vsyncpa [#allocation3], 0
    %s11 = scalar_lea.sflag [#allocation3], 1
    %12 = vsyncpa %s11, 0
    loop: start=0, step=1, limit=4
    $region2: #{model_forward.1} parent=1 // loop_pre_header
      _
    $region3: #{model_forward.1} parent=1 // loop_header
      %s14 = sphi 0, %s18
      %p15 = scmp.ge.s32.totalorder %s14, 4
      %s21 = sphi 0, %s33
      %s22 = sphi 0, %s29
      %s23 = sphi 0, %s21
      %s24 = sphi 0, %s22
      %s25 = sphi 0, %s23
      %s26 = sphi 0, %s24
      %s38 = sphi 0, %s40
      %s41 = sphi 0, %s38
      %s42 = sphi 0, %s41
      %s58 = sphi 0, %s42
      %s62 = sphi 0, %s62
      %s64 = sphi 0, %s62
      %s65 = sphi 0, %s64
      %s79 = sphi 0, %s65
      %s83 = sphi 0, %s83
      %s85 = sphi 0, %s83
      %s86 = sphi 0, %s85
      %s100 = sphi 0, %s86
      %s104 = sphi 0, %s104
      %s106 = sphi 0, %s104
      %s107 = sphi 0, %s106
      %s121 = sphi 0, %s107
      %s127 = sphi 0, %s129
      %s130 = sphi 0, %s127
      %s131 = sphi 0, %s130
      %s147 = sphi 0, %s131
      %s155 = sphi 0, %s157
      %s158 = sphi 0, %s155
      %s159 = sphi 0, %s158
      %s175 = sphi 0, %s159
    $region4: #{model_forward.1} parent=1 // loop_header_branch
      %17 = sbr.rel (%p15) target = $region8
    $region5: #{model_forward.1} parent=1 // loop_body
      %s19 = ssub.s32 %s14, 1
      %s20 = ssub.s32 %s14, 2
      %s27 = sadd.s32 1, %s22
      %p28 = scmp.ge.s32.totalorder %s27, 1
      %s29 = scalar_select %p28, 0, %s27
      %s30 = sadd.s32 1, %s21
      %s31 = scalar_select %p28, %s30, %s21
      %p32 = scmp.ge.s32.totalorder %s31, 2
      %s33 = scalar_select %p32, 0, %s31
      %s34 = ssub.s32 %s21, %s33
      %s35 = ssub.s32 %s22, %s29
      %s36 = sor.u32 %s34, %s35
      %p37 = scmp.eq.s32.totalorder %s36, 0
      %s39 = sadd.s32 %s38, 1
      %s40 = scalar_select %p37, %s38, %s39
      %p43 = pneg %p37
      %p44 = scmp.eq.s32.totalorder %s14, 1
      %p45 = por %p43, %p44
      %p46 = scmp.ne.s32.totalorder %s38, %s41
      %p47 = scmp.eq.s32.totalorder %s14, 0
      %p48 = por %p46, %p47
      %p49 = scmp.ne.s32.totalorder %s38, %s41
      %p50 = scmp.eq.s32.totalorder %s19, 1
      %p51 = por %p49, %p50
      %p52 = scmp.ne.s32.totalorder %s41, %s42
      %p53 = scmp.eq.s32.totalorder %s19, 0
      %p54 = por %p52, %p53
      %p55 = scmp.ne.s32.totalorder %s41, %s42
      %p56 = scmp.eq.s32.totalorder %s20, 1
      %p57 = por %p55, %p56
      %p59 = scmp.ne.s32.totalorder %s42, %s58
      %p60 = scmp.eq.s32.totalorder %s20, 0
      %p61 = por %p59, %p60
      %s63 = sadd.s32 %s62, 1
      %p66 = scmp.eq.s32.totalorder %s14, 1
      %p67 = scmp.ne.s32.totalorder %s62, %s64
      %p68 = scmp.eq.s32.totalorder %s14, 0
      %p69 = por %p67, %p68
      %p70 = scmp.ne.s32.totalorder %s62, %s64
      %p71 = scmp.eq.s32.totalorder %s19, 1
      %p72 = por %p70, %p71
      %p73 = scmp.ne.s32.totalorder %s64, %s65
      %p74 = scmp.eq.s32.totalorder %s19, 0
      %p75 = por %p73, %p74
      %p76 = scmp.ne.s32.totalorder %s64, %s65
      %p77 = scmp.eq.s32.totalorder %s20, 1
      %p78 = por %p76, %p77
      %p80 = scmp.ne.s32.totalorder %s65, %s79
      %p81 = scmp.eq.s32.totalorder %s20, 0
      %p82 = por %p80, %p81
      %s84 = sadd.s32 %s83, 1
      %p87 = scmp.eq.s32.totalorder %s14, 1
      %p88 = scmp.ne.s32.totalorder %s83, %s85
      %p89 = scmp.eq.s32.totalorder %s14, 0
      %p90 = por %p88, %p89
      %p91 = scmp.ne.s32.totalorder %s83, %s85
      %p92 = scmp.eq.s32.totalorder %s19, 1
      %p93 = por %p91, %p92
      %p94 = scmp.ne.s32.totalorder %s85, %s86
      %p95 = scmp.eq.s32.totalorder %s19, 0
      %p96 = por %p94, %p95
      %p97 = scmp.ne.s32.totalorder %s85, %s86
      %p98 = scmp.eq.s32.totalorder %s20, 1
      %p99 = por %p97, %p98
      %p101 = scmp.ne.s32.totalorder %s86, %s100
      %p102 = scmp.eq.s32.totalorder %s20, 0
      %p103 = por %p101, %p102
      %s105 = sadd.s32 %s104, 1
      %p108 = scmp.eq.s32.totalorder %s14, 1
      %p109 = scmp.ne.s32.totalorder %s104, %s106
      %p110 = scmp.eq.s32.totalorder %s14, 0
      %p111 = por %p109, %p110
      %p112 = scmp.ne.s32.totalorder %s104, %s106
      %p113 = scmp.eq.s32.totalorder %s19, 1
      %p114 = por %p112, %p113
      %p115 = scmp.ne.s32.totalorder %s106, %s107
      %p116 = scmp.eq.s32.totalorder %s19, 0
      %p117 = por %p115, %p116
      %p118 = scmp.ne.s32.totalorder %s106, %s107
      %p119 = scmp.eq.s32.totalorder %s20, 1
      %p120 = por %p118, %p119
      %p122 = scmp.ne.s32.totalorder %s107, %s121
      %p123 = scmp.eq.s32.totalorder %s20, 0
      %p124 = por %p122, %p123
      %s125 = ssub.s32 %s22, %s29
      %p126 = scmp.eq.s32.totalorder %s125, 0
      %s128 = sadd.s32 %s127, 1
      %s129 = scalar_select %p126, %s127, %s128
      %p132 = pneg %p126
      %p133 = scmp.eq.s32.totalorder %s14, 1
      %p134 = por %p132, %p133
      %p135 = scmp.ne.s32.totalorder %s127, %s130
      %p136 = scmp.eq.s32.totalorder %s14, 0
      %p137 = por %p135, %p136
      %p138 = scmp.ne.s32.totalorder %s127, %s130
      %p139 = scmp.eq.s32.totalorder %s19, 1
      %p140 = por %p138, %p139
      %p141 = scmp.ne.s32.totalorder %s130, %s131
      %p142 = scmp.eq.s32.totalorder %s19, 0
      %p143 = por %p141, %p142
      %p144 = scmp.ne.s32.totalorder %s130, %s131
      %p145 = scmp.eq.s32.totalorder %s20, 1
      %p146 = por %p144, %p145
      %p148 = scmp.ne.s32.totalorder %s131, %s147
      %p149 = scmp.eq.s32.totalorder %s20, 0
      %p150 = por %p148, %p149
      %s151 = ssub.s32 %s21, %s33
      %s152 = ssub.s32 %s22, %s29
      %s153 = sor.u32 %s151, %s152
      %p154 = scmp.eq.s32.totalorder %s153, 0
      %s156 = sadd.s32 %s155, 1
      %s157 = scalar_select %p154, %s155, %s156
      %p160 = pneg %p154
      %p161 = scmp.eq.s32.totalorder %s14, 1
      %p162 = por %p160, %p161
      %p163 = scmp.ne.s32.totalorder %s155, %s158
      %p164 = scmp.eq.s32.totalorder %s14, 0
      %p165 = por %p163, %p164
      %p166 = scmp.ne.s32.totalorder %s155, %s158
      %p167 = scmp.eq.s32.totalorder %s19, 1
      %p168 = por %p166, %p167
      %p169 = scmp.ne.s32.totalorder %s158, %s159
      %p170 = scmp.eq.s32.totalorder %s19, 0
      %p171 = por %p169, %p170
      %p172 = scmp.ne.s32.totalorder %s158, %s159
      %p173 = scmp.eq.s32.totalorder %s20, 1
      %p174 = por %p172, %p173
      %p176 = scmp.ne.s32.totalorder %s159, %s175
      %p177 = scmp.eq.s32.totalorder %s20, 0
      %p178 = por %p176, %p177
      %p179 = scmp.le.s32.totalorder 1, %s14
      %p180 = scmp.lt.s32.totalorder %s14, 3
      %p181 = pnand %p179, %p180
      %p182 = pneg %p181
      // Predicated region
      $region9: #{model_forward.1} parent=5 // pred_check
        _
      $region10: #{model_forward.1} parent=5 // pred_check_branch
        %184 = sbr.rel (%p181) target = $region12
      $region11: #{model_forward.1} parent=5 // pred_region
        %s185 = ssub.s32 %s14, 1
        // Predicated region
        $region13: #{model_forward.1} parent=11 // pred_check
          %p186 = pneg %p75
        $region14: #{model_forward.1} parent=11 // pred_check_branch
          %188 = sbr.rel (%p186) target = $region16
        $region15: #{model_forward.1} parent=11 // pred_region
          _
        $region16: #{model_forward.1} parent=11 // pred_fallthru
          _
        // Predicated region
        $region17: #{model_forward.1} parent=11 // pred_check
          %p189 = pneg %p96
        $region18: #{model_forward.1} parent=11 // pred_check_branch
          %191 = sbr.rel (%p189) target = $region20
        $region19: #{model_forward.1} parent=11 // pred_region
          _
        $region20: #{model_forward.1} parent=11 // pred_fallthru
          _
        // Predicated region
        $region21: #{model_forward.1} parent=11 // pred_check
          %p192 = pneg %p117
        $region22: #{model_forward.1} parent=11 // pred_check_branch
          %194 = sbr.rel (%p192) target = $region24
        $region23: #{model_forward.1} parent=11 // pred_region
          _
        $region24: #{model_forward.1} parent=11 // pred_fallthru
          _
        // Predicated region
        $region25: #{model_forward.1} parent=11 // pred_check
          %p195 = pneg %p143
        $region26: #{model_forward.1} parent=11 // pred_check_branch
          %197 = sbr.rel (%p195) target = $region28
        $region27: #{model_forward.1} parent=11 // pred_region
          %p198 = scmp.lt.s32.totalorder %s24, 0
          %s199 = scalar_select %p198, %s24, 0
          %s200 = smul.addr %s199, 2
          %s201 = scalar_lea.vmem %s4, %s200
        $region28: #{model_forward.1} parent=11 // pred_fallthru
          _
      $region12: #{model_forward.1} parent=5 // pred_fallthru
        _
      %p202 = scmp.lt.s32.totalorder %s14, 2
      // Predicated region
      $region29: #{model_forward.1} parent=5 // pred_check
        %p203 = pneg %p202
      $region30: #{model_forward.1} parent=5 // pred_check_branch
        %205 = sbr.rel (%p203) target = $region32
      $region31: #{model_forward.1} parent=5 // pred_region
        // Predicated region
        $region33: #{model_forward.1} parent=31 // pred_check
          %p206 = pneg %p48
        $region34: #{model_forward.1} parent=31 // pred_check_branch
          %208 = sbr.rel (%p206) target = $region36
        $region35: #{model_forward.1} parent=31 // pred_region
          %p209 = scmp.lt.s32.totalorder %s21, 1
          %s210 = scalar_select %p209, %s21, 1
          %p211 = scmp.lt.s32.totalorder %s22, 0
          %s212 = scalar_select %p211, %s22, 0
          %s213 = smul.addr %s210, 2
          %s214 = sadd.s32 %s212, %s213
          %s215 = smul.addr %s214, 8
          %s216 = scalar_lea.vmem %s0, %s215
        $region36: #{model_forward.1} parent=31 // pred_fallthru
          _
      $region32: #{model_forward.1} parent=5 // pred_fallthru
        _
      %p217 = scmp.le.s32.totalorder 1, %s14
      %p218 = scmp.lt.s32.totalorder %s14, 3
      %p219 = pnand %p217, %p218
      %p220 = pneg %p219
      // Predicated region
      $region37: #{model_forward.1} parent=5 // pred_check
        _
      $region38: #{model_forward.1} parent=5 // pred_check_branch
        %222 = sbr.rel (%p219) target = $region40
      $region39: #{model_forward.1} parent=5 // pred_region
        %s223 = ssub.s32 %s14, 1
        %p224 = scmp.lt.s32.totalorder %s23, 1
        %s225 = scalar_select %p224, %s23, 1
        %p226 = scmp.lt.s32.totalorder %s24, 0
        %s227 = scalar_select %p226, %s24, 0
        %s228 = smul.addr %s225, 2
        %s229 = sadd.s32 %s227, %s228
        %s230 = smul.addr %s229, 8
        %s231 = scalar_lea.vmem %s0, %s230
        %p232 = pneg %p54
        %p233 = pneg %p51
        %p234 = pneg %p75
        %p235 = pneg %p72
        %p236 = pneg %p96
        %p237 = pneg %p93
        %p238 = pneg %p117
        %p239 = pneg %p114
        %p240 = scmp.lt.s32.totalorder %s24, 0
        %s241 = scalar_select %p240, %s24, 0
        %s242 = smul.addr %s241, 2
        %s243 = scalar_lea.vmem %s4, %s242
        %p244 = pneg %p143
        %p245 = pneg %p140
        %p246 = pneg %p171
        %p247 = pneg %p168
        %s248 = sand.u32 %s158, 1
        %s249 = scalar_lea.sflag [#allocation3], %s248
        %s250 = sand.u32 %s158, 1
        %s251 = smul.addr %s250, 8
        %s252 = scalar_lea.vmem [#allocation2], %s251
        %p253 = scmp.lt.s32.totalorder %s23, 1
        %s254 = scalar_select %p253, %s23, 1
        %p255 = scmp.lt.s32.totalorder %s24, 0
        %s256 = scalar_select %p255, %s24, 0
        %s257 = smul.addr %s254, 2
        %s258 = sadd.s32 %s256, %s257
        %s259 = smul.addr %s258, 8
        %s260 = scalar_lea.vmem %s0, %s259
        %p261 = scmp.lt.s32.totalorder %s24, 0
        %s262 = scalar_select %p261, %s24, 0
        %s263 = smul.addr %s262, 2
        %s264 = scalar_lea.vmem %s4, %s263
        %v266 = vld [vmem:[%s260] sm:$0xff]
        %v267 = vld [vmem:[%s260 + $0x8] sm:$0xff]
        %vm268 = vcmask 64512
        %v269 = vsel %vm268, %v266, 0.0
        %v270 = vsel %vm268, %v267, 0.0
        %v271 = vadd.f32 %v269, %v270
        %v272 = vrot.slane %v271, 4
        %v273 = vadd.f32 %v271, %v272
        %v274 = vrot.slane %v273, 2
        %v275 = vadd.f32 %v273, %v274
        %v276 = vrot.slane %v275, 1
        %v277 = vadd.f32 %v275, %v276
        %v278 = vmul.f32 %v277, 0.0625
        %v279 = vsub.f32 %v266, %v278
        %v280 = vsub.f32 %v267, %v278
        %v281 = vmul.f32 %v279, %v279
        %v282 = vmul.f32 %v280, %v280
        %v283 = vsel %vm268, %v281, 0.0
        %v284 = vsel %vm268, %v282, 0.0
        %v285 = vadd.f32 %v283, %v284
        %v286 = vrot.slane %v285, 4
        %v287 = vadd.f32 %v285, %v286
        %v288 = vrot.slane %v287, 2
        %v289 = vadd.f32 %v287, %v288
        %v290 = vrot.slane %v289, 1
        %v291 = vadd.f32 %v289, %v290
        %v292 = vmul.f32 %v291, 0.0625
        %v293 = vadd.f32 %v292, 1e-05
        %v294 = vrsqrt.pop %v293
        %v295 = vmul.f32 %v293, %v294
        %vm296 = vcmp.eq.f32.partialorder %v293, inf
        %v297 = vsel %vm296, %v293, %v295
        %vm298 = vcmp.eq.f32.partialorder %v293, 0.0
        %v299 = vand.u32 %v293, 2147483648
        %v300 = vsel %vm298, %v299, %v297
        %v301 = vrsqrt.pop %v293
        %v302 = vld [vmem:[%s264] sm:$0x1]
        %v303 = vld [vmem:[%s264 + $0x1] sm:$0x1]
        %v304 = vld [vmem:[%s1] sm:$0xf]
        %v305 = vpack.c.bf16 %v280, %v279
        %vm306 = vcmask 130048
        %v308 = vsel %vm306, %v304, 0
        %310 = vmatprep.subr.bf16.mxu0 0
        %311 = vmatpush1.bf16.msra.mxu0 %v305
        %312 = vmatprep.subr.bf16.mxu0 0
        %313 = vmatpush1.bf16.msra.mxu0 0
        %314 = vmatprep.subr.bf16.mxu0 0
        %315 = vmatpush1.bf16.msra.mxu0 0
        %316 = vmatprep.subr.bf16.mxu0 0
        %317 = vmatpush1.bf16.msra.mxu0 0
        %318 = vmatprep.subr.bf16.mxu0 0
        %319 = vmatpush1.bf16.msra.mxu0 0
        %320 = vmatprep.subr.bf16.mxu0 0
        %321 = vmatpush1.bf16.msra.mxu0 0
        %322 = vmatprep.subr.bf16.mxu0 0
        %323 = vmatpush1.bf16.msra.mxu0 0
        %324 = vmatprep.subr.bf16.mxu0 0
        %325 = vmatpush1.bf16.msra.mxu0 0
        %326 = vmatprep.subr.bf16.mxu0 0
        %327 = vmatpush1.bf16.msra.mxu0 0
        %328 = vmatprep.subr.bf16.mxu0 0
        %329 = vmatpush1.bf16.msra.mxu0 0
        %330 = vmatprep.subr.bf16.mxu0 0
        %331 = vmatpush1.bf16.msra.mxu0 0
        %332 = vmatprep.subr.bf16.mxu0 0
        %333 = vmatpush1.bf16.msra.mxu0 0
        %334 = vmatprep.subr.bf16.mxu0 0
        %335 = vmatpush1.bf16.msra.mxu0 0
        %336 = vmatprep.subr.bf16.mxu0 0
        %337 = vmatpush1.bf16.msra.mxu0 0
        %338 = vmatprep.subr.bf16.mxu0 0
        %339 = vmatpush1.bf16.msra.mxu0 0
        %340 = vmatprep.subr.bf16.mxu0 0
        %341 = vmatpush1.bf16.msra.mxu0 0
        %342 = vmatprep.mubr.bf16.mxu0 0
        %343 = vmatmul.mubr.bf16.gmra.mrb[0].mxu0 %v308
        %v344 = vpop.f32.mrb[0].mxu0
        %v345 = vadd.f32 0.0, %v344
        %v346 = vpop.f32.mrb[0].mxu0
        %v347 = vpop.f32.mrb[0].mxu0
        %v348 = vpop.f32.mrb[0].mxu0
        %349 = vdwg.mxu0
        %v350 = vmul.f32 %v301, %v302
        %v351 = vlaneseq
        %v352 = vshrl.u32 %v351, 7
        %v353 = vsub.s32 0, %v352
        %v354 = vrot.slane %v350, %v353
        %v355 = vmul.f32 %v345, %v354
        %v356 = vld [vmem:[%s3] sm:$0xff]
        %358 = vset.pattern.permute.xlu0 0
        %359 = vperm.xlu0 %358, %v356
        %v360 = vpop.permute.xlu0 %359
        %v362 = vlaneseq
        %v363 = vshrl.u32 %v362, 7
        %v364 = vsub.s32 0, %v363
        %v365 = vrot.slane %v303, %v364
        %v366 = vmul.f32 %v360, %v365
        %v367 = vadd.f32 %v355, %v366
        %v368 = vld [vmem:[%s2] sm:$0xff]
        %370 = vset.pattern.permute.xlu0 0
        %371 = vperm.xlu0 %370, %v368
        %v372 = vpop.permute.xlu0 %371
        %v374 = vadd.f32 %v367, %v372
        %v375 = vadd.f32 %v302, 1e-10
        %v376 = vrcp.pop %v375
        %v377 = vsub.f32 %v374, %v365
        %v378 = vlaneseq
        %v379 = vshrl.u32 %v378, 7
        %v380 = vsub.s32 0, %v379
        %v381 = vrot.slane %v376, %v380
        %v382 = vmul.f32 %v377, %v381
        %v383 = vmul.f32 %v382, %v300
        %v384 = vadd.f32 %v383, %v278
        %385 = vst.msk [vmem:[%s252] sm:$0xff] %vm268, %v384
        %s386 = sand.u32 %s158, 1
        %s387 = scalar_lea.sflag [#allocation3], %s386
        %s388 = sand.u32 %s158, 1
        %s389 = smul.addr %s388, 8
        %s390 = scalar_lea.vmem [#allocation2], %s389
        // Predicated region
        $region41: #{model_forward.1} parent=39 // pred_check
          %p391 = pneg %p168
        $region42: #{model_forward.1} parent=39 // pred_check_branch
          %393 = sbr.rel (%p391) target = $region44
        $region43: #{model_forward.1} parent=39 // pred_region
          %s395 = ssub.s32 128, 128
          %396 = vsyncadd %s387, %s395
          %s397 = sadd.s32 %s24, %s23
          %s398 = smul.addr %s397, 128
          %s399 = scalar_lea.hbm %s5, %s398
          %s401 = sshll.u32 %s390, 4
          %s402 = int_to_ptr.vmem [resolvable:$true] %s401
          %404 = dma.vmem_to_hbm [thread:$0]  %s402, 128, %s399, %s387
        $region44: #{model_forward.1} parent=39 // pred_fallthru
          _
      $region40: #{model_forward.1} parent=5 // pred_fallthru
        _
      %p405 = scmp.le.s32.totalorder 2, %s14
      // Predicated region
      $region45: #{model_forward.1} parent=5 // pred_check
        %p406 = pneg %p405
      $region46: #{model_forward.1} parent=5 // pred_check_branch
        %408 = sbr.rel (%p406) target = $region48
      $region47: #{model_forward.1} parent=5 // pred_region
        %s409 = ssub.s32 %s14, 2
        // Predicated region
        $region49: #{model_forward.1} parent=47 // pred_check
          %p410 = pneg %p174
        $region50: #{model_forward.1} parent=47 // pred_check_branch
          %412 = sbr.rel (%p410) target = $region52
        $region51: #{model_forward.1} parent=47 // pred_region
          %s413 = sand.u32 %s159, 1
          %s414 = scalar_lea.sflag [#allocation3], %s413
          %s415 = sand.u32 %s159, 1
          %s416 = smul.addr %s415, 8
          %s417 = scalar_lea.vmem [#allocation2], %s416
          %418 = dma.done %s414, 128
        $region52: #{model_forward.1} parent=47 // pred_fallthru
          _
      $region48: #{model_forward.1} parent=5 // pred_fallthru
        _
    $region6: #{model_forward.1} parent=1 // loop_footer
      %s18 = sadd.s32 1, %s14
    $region7: #{model_forward.1} parent=1 // loop_footer_branch
      %13 = sbr.rel target = $region3
    $region8: #{model_forward.1} parent=1 // loop_exit
      _
    %419 = vsyncpa [#allocation3], 1
    %s420 = scalar_lea.sflag [#allocation3], 1
    %421 = vsyncpa %s420, 1

</llo_original>
